<compile_context>
chip_gen: v6e
topology: v6e:2x2x1
jax: 0.10.0
libtpu: 0.0.40
codegen_flags: <defaults>
</compile_context>

<pallas_src>
import functools
import math

import jax
import jax.numpy as jnp
from jax import lax
from jax.experimental import pallas as pl
from jax.experimental.pallas import tpu as pltpu


def _round_up(x, m):
    return ((x + m - 1) // m) * m


def diffnn_kernel(x_ref, xt_ref, xtsq_ref, oh_ref, out_ref,
                  m_ref, acc_ref, *, s2, log_eps, denom_col, use_bf16_exp):
    nk = pl.program_id(1)

    @pl.when(nk == 0)
    def _():
        m_ref[...] = jnp.full(m_ref.shape, -jnp.inf, dtype=jnp.float32)
        acc_ref[...] = jnp.zeros(acc_ref.shape, dtype=jnp.float32)

    # gram = x @ xt.T without materializing a transpose (contract on features).
    gram = lax.dot_general(
        x_ref[...], xt_ref[...],
        dimension_numbers=(((1,), (1,)), ((), ())),
        preferred_element_type=jnp.float32)                      # (TB, TN) on MXU

    # logits = -s2 * (||x||^2 - 2 x.xt + ||xt||^2); ||x||^2 is constant along
    # the softmax axis and cancels, so drop it.
    logits = (2.0 * s2) * gram - s2 * xtsq_ref[...]              # (TB, TN)

    # Online softmax update (max via XLU; denominator comes out of the MXU
    # via the ones column of oh_ref, no per-step row-sum).
    m_prev = m_ref[...]
    m_new = jnp.maximum(m_prev, jnp.max(logits, axis=-1, keepdims=True))
    if use_bf16_exp:
        # EUP-bound regime at small D (v6e/v7x bf16 EUP); keep accumulation f32.
        alpha = jnp.exp((m_prev - m_new).astype(jnp.bfloat16)).astype(jnp.float32)
        e = jnp.exp((logits - m_new).astype(jnp.bfloat16)).astype(jnp.float32)
    else:
        alpha = jnp.exp(m_prev - m_new)
        e = jnp.exp(logits - m_new)

    acc_ref[...] = alpha * acc_ref[...] + jnp.dot(
        e, oh_ref[...], preferred_element_type=jnp.float32)      # (TB, C_pad)
    m_ref[...] = m_new

    @pl.when(nk == pl.num_programs(1) - 1)
    def _():
        # p = acc[:, :C] / acc[:, C]; log(max(p, eps)) == max(log(num)-log(den), log_eps)
        la = jnp.log(acc_ref[...])                               # (TB, C_pad)
        out_ref[...] = jnp.maximum(
            la - la[:, denom_col:denom_col + 1], log_eps)


def diffnn_forward(X, X_train, y_onehot, smoothness=1.0, eps=1e-8,
                   tb=None, tn=None, use_bf16_gram=False, use_bf16_exp=False,
                   xtrain_buffers=2):
    X = jnp.asarray(X, jnp.float32)
    X_train = jnp.asarray(X_train, jnp.float32)
    y_onehot = jnp.asarray(y_onehot, jnp.float32)

    B, D = X.shape
    N, _ = X_train.shape
    C = y_onehot.shape[1]

    # --- generation-aware defaults -------------------------------------------------
    kind = ""
    try:
        kind = jax.devices()[0].device_kind.lower()
    except Exception:
        pass
    is_v7 = ("v7" in kind) or ("7x" in kind)
    if tb is None:
        if "v6" in kind:
            tb = 256                        # fill the 2x256x256 MXU
        elif is_v7:
            tb = 256 if B > 256 else 128    # keep both TCs busy on the parallel axis
        else:
            tb = 128                        # v5e: 128-aligned tiles are MXU-native
    if tn is None:
        tn = 1024                           # fewer/longer reduction steps, longer DMAs

    # Hardware-aligned tiles: TB multiple of 8 (16 for bf16 sublane packing),
    # TN multiple of 128 (lane).
    sub = 16 if use_bf16_gram else 8
    tb = _round_up(max(tb, sub), sub)
    tn = _round_up(max(tn, 128), 128)
    TB = min(_round_up(B, sub), tb)
    TN = min(_round_up(N, 128), tn)
    B_pad = _round_up(B, TB)
    N_pad = _round_up(N, TN)

    # Lane-dense class axis: pad to a multiple of 128 and reserve column C for
    # the softmax-denominator ones column.
    C_pad = _round_up(C + 1, 128)

    # Hoisted once: ||xt||^2 per training point (O(N*D) total, in f32).
    xt_sq = jnp.sum(X_train * X_train, axis=-1)                  # (N,)

    in_dtype = jnp.bfloat16 if use_bf16_gram else jnp.float32
    Xp = jnp.pad(X, ((0, B_pad - B), (0, 0))).astype(in_dtype)
    Xtp = jnp.pad(X_train, ((0, N_pad - N), (0, 0))).astype(in_dtype)

    # onehot padded to (N_pad, C_pad); column C is 1 only for REAL training rows,
    # so the denominator is exactly the sum over real points.
    ohp = jnp.zeros((N_pad, C_pad), jnp.float32)
    ohp = ohp.at[:N, :C].set(y_onehot)
    ohp = ohp.at[:N, C].set(1.0)

    # Padded training columns get a huge ||xt||^2 -> logits ~ -inf -> weight 0.
    xtsq_p = jnp.pad(xt_sq, (0, N_pad - N),
                     constant_values=1e30).reshape(1, N_pad)

    kernel = functools.partial(
        diffnn_kernel,
        s2=float(smoothness) ** 2,
        log_eps=float(math.log(eps)),
        denom_col=C,
        use_bf16_exp=bool(use_bf16_exp))

    # Scoped-VMEM estimate: double-buffered inputs + output, scratch, and
    # ~4 x (TB, TN) f32 compiler temporaries (gram / logits / e / alpha*acc).
    itemsize = 2 if use_bf16_gram else 4
    vmem_est = (2 * (TB * D + TN * D) * itemsize
                + 2 * (TN + TN * C_pad + TB * C_pad) * 4
                + (TB * C_pad + 2 * TB) * 4
                + 4 * TB * TN * 4)
    vmem_cap = (48 << 20) if is_v7 else (64 << 20)   # v7x: 64 MiB physical per TC
    vmem_limit = int(min(max(1.5 * vmem_est, 32 << 20), vmem_cap))

    # Optional deeper pipelining of the X_train stream (only if DMA is exposed
    # at small D); default 2 = standard double buffering.
    xt_spec_kwargs = {}
    if xtrain_buffers and int(xtrain_buffers) > 2:
        xt_spec_kwargs = dict(pipeline_mode=pl.Buffered(int(xtrain_buffers)))
    xt_spec = pl.BlockSpec((TN, D), lambda i, j: (j, 0), **xt_spec_kwargs)

    out = pl.pallas_call(
        kernel,
        out_shape=jax.ShapeDtypeStruct((B_pad, C_pad), jnp.float32),
        grid=(B_pad // TB, N_pad // TN),              # reduction (N) axis last
        in_specs=[
            pl.BlockSpec((TB, D), lambda i, j: (i, 0)),      # X queries
            xt_spec,                                         # X_train
            pl.BlockSpec((1, TN), lambda i, j: (0, j)),      # ||xt||^2
            pl.BlockSpec((TN, C_pad), lambda i, j: (j, 0)),  # onehot + ones column
        ],
        out_specs=pl.BlockSpec((TB, C_pad), lambda i, j: (i, 0)),  # resident across j
        scratch_shapes=[
            pltpu.VMEM((TB, 1), jnp.float32),       # running max
            pltpu.VMEM((TB, C_pad), jnp.float32),   # running class + denom accumulator
        ],
        compiler_params=pltpu.CompilerParams(
            dimension_semantics=("parallel", "arbitrary"),
            vmem_limit_bytes=vmem_limit,
        ),
    )(Xp, Xtp, xtsq_p, ohp)

    return out[:B, :C]


def diffnn_reference(X, X_train, y_onehot, smoothness=1.0, eps=1e-8):
    hi = jax.lax.Precision.HIGHEST
    gram = jnp.dot(X, X_train.T, precision=hi)
    D = (-2.0 * gram
         + jnp.sum(X * X, axis=-1, keepdims=True)
         + jnp.sum(X_train * X_train, axis=-1)[None, :])
    logits = -D * smoothness ** 2
    w = jax.nn.softmax(logits, axis=1)
    p = jnp.dot(w, y_onehot, precision=hi)
    return jnp.log(jnp.maximum(p, eps))


if __name__ == "__main__":
    key = jax.random.PRNGKey(0)
    k1, k2, k3 = jax.random.split(key, 3)

    # Small shapes that still exercise B-tiling, N-tiling (online softmax across
    # 3 training-point tiles), ragged-tail padding, and C->128 lane padding.
    B, Dfeat, N, C = 12, 32, 300, 4
    smoothness, eps = 0.5, 1e-8

    X = jax.random.normal(k1, (B, Dfeat), dtype=jnp.float32)
    X_train = jax.random.normal(k2, (N, Dfeat), dtype=jnp.float32)
    y_train = jax.random.randint(k3, (N,), 0, C, dtype=jnp.int32)
    y_onehot = jax.nn.one_hot(y_train, C, dtype=jnp.float32)   # glue: label encoding

    ref = diffnn_reference(X, X_train, y_onehot, smoothness=smoothness, eps=eps)

    # f32 path (tight tolerance), tiny tiles to exercise both grid axes.
    out = diffnn_forward(X, X_train, y_onehot, smoothness=smoothness, eps=eps,
                         tb=8, tn=128)
    out = jax.block_until_ready(out)
    assert out.shape == (B, C)
    assert jnp.allclose(out, ref, atol=2e-3, rtol=2e-3), \
        float(jnp.max(jnp.abs(out - ref)))

    # bf16-streamed gram path (wrapper-side cast, halved X_train HBM traffic);
    # looser tolerance for the bf16 input rounding.
    out_bf16 = diffnn_forward(X, X_train, y_onehot, smoothness=smoothness,
                              eps=eps, tb=16, tn=128, use_bf16_gram=True)
    out_bf16 = jax.block_until_ready(out_bf16)
    assert out_bf16.shape == (B, C)
    assert jnp.allclose(out_bf16, ref, atol=1e-1, rtol=1e-1), \
        float(jnp.max(jnp.abs(out_bf16 - ref)))

    print("KERNEL_OK")
</pallas_src>

<mosaic_0001>
module attributes {stable_mosaic.version = 11 : i64} {
  func.func @diffnn_kernel(%arg0: i32, %arg1: i32, %arg2: memref<8x32xf32, #tpu.memory_space<vmem>>, %arg3: memref<128x32xf32, #tpu.memory_space<vmem>>, %arg4: memref<1x128xf32, #tpu.memory_space<vmem>>, %arg5: memref<128x128xf32, #tpu.memory_space<vmem>>, %arg6: memref<8x128xf32, #tpu.memory_space<vmem>>, %arg7: memref<8x1xf32, #tpu.memory_space<vmem>>, %arg8: memref<8x128xf32, #tpu.memory_space<vmem>>) attributes {dimension_semantics = [#tpu.dimension_semantics<parallel>, #tpu.dimension_semantics<arbitrary>], iteration_bounds = array<i64: 2, 3>, scalar_prefetch = 0 : i64, scratch_operands = 2 : i64, tpu.core_type = #tpu.core_type<tc>, window_params = [{transform_indices = @transform_0, window_bounds = array<i64: 8, 32>}, {transform_indices = @transform_1, window_bounds = array<i64: 128, 32>}, {transform_indices = @transform_2, window_bounds = array<i64: 1, 128>}, {transform_indices = @transform_3, window_bounds = array<i64: 128, 128>}, {transform_indices = @transform_4, window_bounds = array<i64: 8, 128>}]} {
    %c0_i32 = arith.constant 0 : i32
    %0 = arith.cmpi eq, %arg1, %c0_i32 : i32
    %1 = arith.extui %0 : i1 to i32
    %c0_i32_0 = arith.constant 0 : i32
    %2 = arith.cmpi ne, %1, %c0_i32_0 : i32
    scf.if %2 {
      %cst_21 = arith.constant 0xFF800000 : f32
      %33 = vector.broadcast %cst_21 : f32 to vector<8x1xf32>
      %c0_22 = arith.constant 0 : index
      %c0_23 = arith.constant 0 : index
      %34 = vector.load %arg7[%c0_22, %c0_23] : memref<8x1xf32, #tpu.memory_space<vmem>>, vector<8x1xf32>
      tpu.vector_store %arg7[%c0_22, %c0_23], %33 {strides = array<i32>} : memref<8x1xf32, #tpu.memory_space<vmem>>, vector<8x1xf32>,
      %cst_24 = arith.constant 0.000000e+00 : f32
      %35 = vector.broadcast %cst_24 : f32 to vector<8x128xf32>
      %c0_25 = arith.constant 0 : index
      %c0_26 = arith.constant 0 : index
      %36 = vector.load %arg8[%c0_25, %c0_26] : memref<8x128xf32, #tpu.memory_space<vmem>>, vector<8x128xf32>
      tpu.vector_store %arg8[%c0_25, %c0_26], %35 {strides = array<i32>} : memref<8x128xf32, #tpu.memory_space<vmem>>, vector<8x128xf32>,
    } else {
    }
    %c0 = arith.constant 0 : index
    %c0_1 = arith.constant 0 : index
    %3 = vector.load %arg2[%c0, %c0_1] : memref<8x32xf32, #tpu.memory_space<vmem>>, vector<8x32xf32>
    %c0_2 = arith.constant 0 : index
    %c0_3 = arith.constant 0 : index
    %4 = vector.load %arg3[%c0_2, %c0_3] : memref<128x32xf32, #tpu.memory_space<vmem>>, vector<128x32xf32>
    %cst = arith.constant dense<0.000000e+00> : vector<8x128xf32>
    %5 = tpu.matmul %3, %4, %cst {dimension_numbers = #tpu.dot_dimension_numbers<[1], [1], [0], [0], [0, 0, 1, 0], [], []>} : vector<8x32xf32>, vector<128x32xf32>, vector<8x128xf32> -> vector<8x128xf32>
    %cst_4 = arith.constant 5.000000e-01 : f32
    %6 = vector.broadcast %cst_4 : f32 to vector<8x128xf32>
    %7 = arith.mulf %6, %5 : vector<8x128xf32>
    %c0_5 = arith.constant 0 : index
    %c0_6 = arith.constant 0 : index
    %8 = vector.load %arg4[%c0_5, %c0_6] : memref<1x128xf32, #tpu.memory_space<vmem>>, vector<1x128xf32>
    %cst_7 = arith.constant 2.500000e-01 : f32
    %9 = vector.broadcast %cst_7 : f32 to vector<1x128xf32>
    %10 = arith.mulf %9, %8 : vector<1x128xf32>
    %11 = vector.broadcast %10 : vector<1x128xf32> to vector<8x128xf32>
    %12 = arith.subf %7, %11 : vector<8x128xf32>
    %c0_8 = arith.constant 0 : index
    %c0_9 = arith.constant 0 : index
    %13 = vector.load %arg7[%c0_8, %c0_9] : memref<8x1xf32, #tpu.memory_space<vmem>>, vector<8x1xf32>
    %cst_10 = arith.constant dense<0xFF800000> : vector<8xf32>
    %14 = vector.multi_reduction <maximumf>, %12, %cst_10 [1] : vector<8x128xf32> to vector<8xf32>
    %15 = vector.shape_cast %14 : vector<8xf32> to vector<8x1xf32>
    %16 = arith.maximumf %13, %15 : vector<8x1xf32>
    %17 = arith.subf %13, %16 : vector<8x1xf32>
    %18 = math.exp %17 : vector<8x1xf32>
    %19 = vector.broadcast %16 : vector<8x1xf32> to vector<8x128xf32>
    %20 = arith.subf %12, %19 : vector<8x128xf32>
    %21 = math.exp %20 : vector<8x128xf32>
    %c0_11 = arith.constant 0 : index
    %c0_12 = arith.constant 0 : index
    %22 = vector.load %arg8[%c0_11, %c0_12] : memref<8x128xf32, #tpu.memory_space<vmem>>, vector<8x128xf32>
    %23 = vector.broadcast %18 : vector<8x1xf32> to vector<8x128xf32>
    %24 = arith.mulf %23, %22 : vector<8x128xf32>
    %c0_13 = arith.constant 0 : index
    %c0_14 = arith.constant 0 : index
    %25 = vector.load %arg5[%c0_13, %c0_14] : memref<128x128xf32, #tpu.memory_space<vmem>>, vector<128x128xf32>
    %cst_15 = arith.constant dense<0.000000e+00> : vector<8x128xf32>
    %26 = tpu.matmul %21, %25, %cst_15 {dimension_numbers = #tpu.dot_dimension_numbers<[1], [0], [0], [1], [0, 0, 1, 1], [], []>} : vector<8x128xf32>, vector<128x128xf32>, vector<8x128xf32> -> vector<8x128xf32>
    %27 = arith.addf %24, %26 : vector<8x128xf32>
    %c0_16 = arith.constant 0 : index
    %c0_17 = arith.constant 0 : index
    %28 = vector.load %arg8[%c0_16, %c0_17] : memref<8x128xf32, #tpu.memory_space<vmem>>, vector<8x128xf32>
    tpu.vector_store %arg8[%c0_16, %c0_17], %27 {strides = array<i32>} : memref<8x128xf32, #tpu.memory_space<vmem>>, vector<8x128xf32>,
    %c0_18 = arith.constant 0 : index
    %c0_19 = arith.constant 0 : index
    %29 = vector.load %arg7[%c0_18, %c0_19] : memref<8x1xf32, #tpu.memory_space<vmem>>, vector<8x1xf32>
    tpu.vector_store %arg7[%c0_18, %c0_19], %16 {strides = array<i32>} : memref<8x1xf32, #tpu.memory_space<vmem>>, vector<8x1xf32>,
    %c2_i32 = arith.constant 2 : i32
    %30 = arith.cmpi eq, %arg1, %c2_i32 : i32
    %31 = arith.extui %30 : i1 to i32
    %c0_i32_20 = arith.constant 0 : i32
    %32 = arith.cmpi ne, %31, %c0_i32_20 : i32
    scf.if %32 {
      %c0_21 = arith.constant 0 : index
      %c0_22 = arith.constant 0 : index
      %33 = vector.load %arg8[%c0_21, %c0_22] : memref<8x128xf32, #tpu.memory_space<vmem>>, vector<8x128xf32>
      %34 = math.log %33 : vector<8x128xf32>
      %35 = vector.extract_strided_slice %34 {offsets = [0, 4], sizes = [8, 1], strides = [1, 1]} : vector<8x128xf32> to vector<8x1xf32>
      %36 = vector.broadcast %35 : vector<8x1xf32> to vector<8x128xf32>
      %37 = arith.subf %34, %36 : vector<8x128xf32>
      %cst_23 = arith.constant -18.420681 : f32
      %38 = vector.broadcast %cst_23 : f32 to vector<8x128xf32>
      %39 = arith.maximumf %37, %38 : vector<8x128xf32>
      %c0_24 = arith.constant 0 : index
      %c0_25 = arith.constant 0 : index
      %40 = vector.load %arg6[%c0_24, %c0_25] : memref<8x128xf32, #tpu.memory_space<vmem>>, vector<8x128xf32>
      tpu.vector_store %arg6[%c0_24, %c0_25], %39 {strides = array<i32>} : memref<8x128xf32, #tpu.memory_space<vmem>>, vector<8x128xf32>,
    } else {
    }
    return
  }
  func.func @transform_0(%arg0: i32, %arg1: i32) -> (i32, i32) {
    %c0_i32 = arith.constant 0 : i32
    %c0_i32_0 = arith.constant 0 : i32
    return %arg0, %c0_i32 : i32, i32
  }
  func.func @transform_1(%arg0: i32, %arg1: i32) -> (i32, i32) {
    %c0_i32 = arith.constant 0 : i32
    %c0_i32_0 = arith.constant 0 : i32
    return %arg1, %c0_i32 : i32, i32
  }
  func.func @transform_2(%arg0: i32, %arg1: i32) -> (i32, i32) {
    %c0_i32 = arith.constant 0 : i32
    %c0_i32_0 = arith.constant 0 : i32
    return %c0_i32, %arg1 : i32, i32
  }
  func.func @transform_3(%arg0: i32, %arg1: i32) -> (i32, i32) {
    %c0_i32 = arith.constant 0 : i32
    %c0_i32_0 = arith.constant 0 : i32
    return %arg1, %c0_i32 : i32, i32
  }
  func.func @transform_4(%arg0: i32, %arg1: i32) -> (i32, i32) {
    %c0_i32 = arith.constant 0 : i32
    %c0_i32_0 = arith.constant 0 : i32
    return %arg0, %c0_i32 : i32, i32
  }
}

</mosaic_0001>

<llo_original>
// kernel: tpu_custom_call.1
$region0: #{tpu_custom_call.1}
  #allocation0 [shape = 'u32[]', space=smem, size = 0x4, offset = 0x4, fixed_abs, tag = 'smem constant byte address 0x4 - core index']
  #allocation1 [shape = 'u32[144,128]{1,0:T(1,128)}', space=vmem, size = 0x12000, scoped, tag = 'internal scratch']
  #allocation2 [shape = 'f32[8,1]{1,0:T(8,128)}', space=vmem, size = 0x1000, scoped, tag = 'scratch operand']
  #allocation3 [shape = 'f32[8,128]{1,0:T(8,128)}', space=vmem, size = 0x1000, scoped, tag = 'scratch operand']
  %s0 = inlined_call_operand.vmem [shape: f32[16,32], index: 0, kind: input, shape index: {}]
  %s1 = inlined_call_operand.vmem [shape: f32[384,32], index: 1, kind: input, shape index: {}]
  %s2 = inlined_call_operand.vmem [shape: f32[1,384], index: 2, kind: input, shape index: {}]
  %s3 = inlined_call_operand.vmem [shape: f32[384,128], index: 3, kind: input, shape index: {}]
  %s4 = inlined_call_operand.hbm [shape: f32[16,128], index: 4, kind: output, shape index: {}]
  %s5 = sld [smem:[#allocation0]]
  $region57: #{tpu_custom_call.1} parent=0
    _
  %s7 = ssub.s32 1, %s5
  %s8 = scalar_select 0, %s7, %s5
  $region1: #{tpu_custom_call.1} parent=0
    #allocation4 [shape = 'u8[8192]{0}', space=vmem, size = 0x2000, scoped, tag = 'output window, operand 0']
    #allocation5 [shape = 's32[2]{0}', space=sflag, size = 0x8, scoped, tag = 'scoped memory for tpu_custom_call.1']
    %9 = vsyncpa [#allocation5], 0
    %s10 = scalar_lea.sflag [#allocation5], 1
    %11 = vsyncpa %s10, 0
    loop: start=0, step=1, limit=8
    $region2: #{tpu_custom_call.1} parent=1 // loop_pre_header
      _
    $region3: #{tpu_custom_call.1} parent=1 // loop_header
      %s13 = sphi 0, %s17
      %p14 = scmp.ge.s32.totalorder %s13, 8
      %s20 = sphi 0, %s32
      %s21 = sphi 0, %s28
      %s22 = sphi 0, %s20
      %s23 = sphi 0, %s21
      %s24 = sphi 0, %s22
      %s25 = sphi 0, %s23
      %s35 = sphi 0, %s37
      %s38 = sphi 0, %s35
      %s39 = sphi 0, %s38
      %s55 = sphi 0, %s39
      %s61 = sphi 0, %s63
      %s64 = sphi 0, %s61
      %s65 = sphi 0, %s64
      %s81 = sphi 0, %s65
      %s87 = sphi 0, %s89
      %s90 = sphi 0, %s87
      %s91 = sphi 0, %s90
      %s107 = sphi 0, %s91
      %s113 = sphi 0, %s115
      %s116 = sphi 0, %s113
      %s117 = sphi 0, %s116
      %s133 = sphi 0, %s117
      %s139 = sphi 0, %s141
      %s142 = sphi 0, %s139
      %s143 = sphi 0, %s142
      %s159 = sphi 0, %s143
    $region4: #{tpu_custom_call.1} parent=1 // loop_header_branch
      %16 = sbr.rel (%p14) target = $region8
    $region5: #{tpu_custom_call.1} parent=1 // loop_body
      %s18 = ssub.s32 %s13, 1
      %s19 = ssub.s32 %s13, 2
      %s26 = sadd.s32 1, %s21
      %p27 = scmp.ge.s32.totalorder %s26, 3
      %s28 = scalar_select %p27, 0, %s26
      %s29 = sadd.s32 1, %s20
      %s30 = scalar_select %p27, %s29, %s20
      %p31 = scmp.ge.s32.totalorder %s30, 2
      %s32 = scalar_select %p31, 0, %s30
      %s33 = ssub.s32 %s20, %s32
      %p34 = scmp.eq.s32.totalorder %s33, 0
      %s36 = sadd.s32 %s35, 1
      %s37 = scalar_select %p34, %s35, %s36
      %p40 = pneg %p34
      %p41 = scmp.eq.s32.totalorder %s13, 5
      %p42 = por %p40, %p41
      %p43 = scmp.ne.s32.totalorder %s35, %s38
      %p44 = scmp.eq.s32.totalorder %s13, 0
      %p45 = por %p43, %p44
      %p46 = scmp.ne.s32.totalorder %s35, %s38
      %p47 = scmp.eq.s32.totalorder %s18, 5
      %p48 = por %p46, %p47
      %p49 = scmp.ne.s32.totalorder %s38, %s39
      %p50 = scmp.eq.s32.totalorder %s18, 0
      %p51 = por %p49, %p50
      %p52 = scmp.ne.s32.totalorder %s38, %s39
      %p53 = scmp.eq.s32.totalorder %s19, 5
      %p54 = por %p52, %p53
      %p56 = scmp.ne.s32.totalorder %s39, %s55
      %p57 = scmp.eq.s32.totalorder %s19, 0
      %p58 = por %p56, %p57
      %s59 = ssub.s32 %s21, %s28
      %p60 = scmp.eq.s32.totalorder %s59, 0
      %s62 = sadd.s32 %s61, 1
      %s63 = scalar_select %p60, %s61, %s62
      %p66 = pneg %p60
      %p67 = scmp.eq.s32.totalorder %s13, 5
      %p68 = por %p66, %p67
      %p69 = scmp.ne.s32.totalorder %s61, %s64
      %p70 = scmp.eq.s32.totalorder %s13, 0
      %p71 = por %p69, %p70
      %p72 = scmp.ne.s32.totalorder %s61, %s64
      %p73 = scmp.eq.s32.totalorder %s18, 5
      %p74 = por %p72, %p73
      %p75 = scmp.ne.s32.totalorder %s64, %s65
      %p76 = scmp.eq.s32.totalorder %s18, 0
      %p77 = por %p75, %p76
      %p78 = scmp.ne.s32.totalorder %s64, %s65
      %p79 = scmp.eq.s32.totalorder %s19, 5
      %p80 = por %p78, %p79
      %p82 = scmp.ne.s32.totalorder %s65, %s81
      %p83 = scmp.eq.s32.totalorder %s19, 0
      %p84 = por %p82, %p83
      %s85 = ssub.s32 %s21, %s28
      %p86 = scmp.eq.s32.totalorder %s85, 0
      %s88 = sadd.s32 %s87, 1
      %s89 = scalar_select %p86, %s87, %s88
      %p92 = pneg %p86
      %p93 = scmp.eq.s32.totalorder %s13, 5
      %p94 = por %p92, %p93
      %p95 = scmp.ne.s32.totalorder %s87, %s90
      %p96 = scmp.eq.s32.totalorder %s13, 0
      %p97 = por %p95, %p96
      %p98 = scmp.ne.s32.totalorder %s87, %s90
      %p99 = scmp.eq.s32.totalorder %s18, 5
      %p100 = por %p98, %p99
      %p101 = scmp.ne.s32.totalorder %s90, %s91
      %p102 = scmp.eq.s32.totalorder %s18, 0
      %p103 = por %p101, %p102
      %p104 = scmp.ne.s32.totalorder %s90, %s91
      %p105 = scmp.eq.s32.totalorder %s19, 5
      %p106 = por %p104, %p105
      %p108 = scmp.ne.s32.totalorder %s91, %s107
      %p109 = scmp.eq.s32.totalorder %s19, 0
      %p110 = por %p108, %p109
      %s111 = ssub.s32 %s21, %s28
      %p112 = scmp.eq.s32.totalorder %s111, 0
      %s114 = sadd.s32 %s113, 1
      %s115 = scalar_select %p112, %s113, %s114
      %p118 = pneg %p112
      %p119 = scmp.eq.s32.totalorder %s13, 5
      %p120 = por %p118, %p119
      %p121 = scmp.ne.s32.totalorder %s113, %s116
      %p122 = scmp.eq.s32.totalorder %s13, 0
      %p123 = por %p121, %p122
      %p124 = scmp.ne.s32.totalorder %s113, %s116
      %p125 = scmp.eq.s32.totalorder %s18, 5
      %p126 = por %p124, %p125
      %p127 = scmp.ne.s32.totalorder %s116, %s117
      %p128 = scmp.eq.s32.totalorder %s18, 0
      %p129 = por %p127, %p128
      %p130 = scmp.ne.s32.totalorder %s116, %s117
      %p131 = scmp.eq.s32.totalorder %s19, 5
      %p132 = por %p130, %p131
      %p134 = scmp.ne.s32.totalorder %s117, %s133
      %p135 = scmp.eq.s32.totalorder %s19, 0
      %p136 = por %p134, %p135
      %s137 = ssub.s32 %s20, %s32
      %p138 = scmp.eq.s32.totalorder %s137, 0
      %s140 = sadd.s32 %s139, 1
      %s141 = scalar_select %p138, %s139, %s140
      %p144 = pneg %p138
      %p145 = scmp.eq.s32.totalorder %s13, 5
      %p146 = por %p144, %p145
      %p147 = scmp.ne.s32.totalorder %s139, %s142
      %p148 = scmp.eq.s32.totalorder %s13, 0
      %p149 = por %p147, %p148
      %p150 = scmp.ne.s32.totalorder %s139, %s142
      %p151 = scmp.eq.s32.totalorder %s18, 5
      %p152 = por %p150, %p151
      %p153 = scmp.ne.s32.totalorder %s142, %s143
      %p154 = scmp.eq.s32.totalorder %s18, 0
      %p155 = por %p153, %p154
      %p156 = scmp.ne.s32.totalorder %s142, %s143
      %p157 = scmp.eq.s32.totalorder %s19, 5
      %p158 = por %p156, %p157
      %p160 = scmp.ne.s32.totalorder %s143, %s159
      %p161 = scmp.eq.s32.totalorder %s19, 0
      %p162 = por %p160, %p161
      %p163 = scmp.le.s32.totalorder 1, %s13
      %p164 = scmp.lt.s32.totalorder %s13, 7
      %p165 = pnand %p163, %p164
      %p166 = pneg %p165
      // Predicated region
      $region9: #{tpu_custom_call.1} parent=5 // pred_check
        _
      $region10: #{tpu_custom_call.1} parent=5 // pred_check_branch
        %168 = sbr.rel (%p165) target = $region12
      $region11: #{tpu_custom_call.1} parent=5 // pred_region
        %s169 = ssub.s32 %s13, 1
      $region12: #{tpu_custom_call.1} parent=5 // pred_fallthru
        _
      %p170 = scmp.lt.s32.totalorder %s13, 6
      // Predicated region
      $region13: #{tpu_custom_call.1} parent=5 // pred_check
        %p171 = pneg %p170
      $region14: #{tpu_custom_call.1} parent=5 // pred_check_branch
        %173 = sbr.rel (%p171) target = $region16
      $region15: #{tpu_custom_call.1} parent=5 // pred_region
        // Predicated region
        $region17: #{tpu_custom_call.1} parent=15 // pred_check
          %p174 = pneg %p45
        $region18: #{tpu_custom_call.1} parent=15 // pred_check_branch
          %176 = sbr.rel (%p174) target = $region20
        $region19: #{tpu_custom_call.1} parent=15 // pred_region
          %p177 = scmp.lt.s32.totalorder %s20, 1
          %s178 = scalar_select %p177, %s20, 1
          %s179 = smul.addr %s178, 8
          %s180 = scalar_lea.vmem %s0, %s179
        $region20: #{tpu_custom_call.1} parent=15 // pred_fallthru
          _
        // Predicated region
        $region21: #{tpu_custom_call.1} parent=15 // pred_check
          %p181 = pneg %p71
        $region22: #{tpu_custom_call.1} parent=15 // pred_check_branch
          %183 = sbr.rel (%p181) target = $region24
        $region23: #{tpu_custom_call.1} parent=15 // pred_region
          %s184 = smul.u32 16, %s21
          %p185 = scmp.lt.s32.totalorder %s184, 47
          %s186 = scalar_select %p185, %s184, 47
          %s187 = smul.addr %s186, 8
          %s188 = scalar_lea.vmem %s1, %s187
          %s189 = smul.u32 16, %s21
        $region24: #{tpu_custom_call.1} parent=15 // pred_fallthru
          _
        // Predicated region
        $region25: #{tpu_custom_call.1} parent=15 // pred_check
          %p190 = pneg %p97
        $region26: #{tpu_custom_call.1} parent=15 // pred_check_branch
          %192 = sbr.rel (%p190) target = $region28
        $region27: #{tpu_custom_call.1} parent=15 // pred_region
          %p193 = scmp.lt.s32.totalorder %s21, 2
          %s194 = scalar_select %p193, %s21, 2
          %s195 = scalar_lea.vmem %s2, %s194
        $region28: #{tpu_custom_call.1} parent=15 // pred_fallthru
          _
        // Predicated region
        $region29: #{tpu_custom_call.1} parent=15 // pred_check
          %p196 = pneg %p123
        $region30: #{tpu_custom_call.1} parent=15 // pred_check_branch
          %198 = sbr.rel (%p196) target = $region32
        $region31: #{tpu_custom_call.1} parent=15 // pred_region
          %s199 = smul.u32 16, %s21
          %p200 = scmp.lt.s32.totalorder %s199, 47
          %s201 = scalar_select %p200, %s199, 47
          %s202 = smul.addr %s201, 8
          %s203 = scalar_lea.vmem %s3, %s202
          %s204 = smul.u32 16, %s21
        $region32: #{tpu_custom_call.1} parent=15 // pred_fallthru
          _
      $region16: #{tpu_custom_call.1} parent=5 // pred_fallthru
        _
      %p205 = scmp.le.s32.totalorder 1, %s13
      %p206 = scmp.lt.s32.totalorder %s13, 7
      %p207 = pnand %p205, %p206
      %p208 = pneg %p207
      // Predicated region
      $region33: #{tpu_custom_call.1} parent=5 // pred_check
        _
      $region34: #{tpu_custom_call.1} parent=5 // pred_check_branch
        %210 = sbr.rel (%p207) target = $region36
      $region35: #{tpu_custom_call.1} parent=5 // pred_region
        %s211 = ssub.s32 %s13, 1
        %p212 = scmp.lt.s32.totalorder %s22, 1
        %s213 = scalar_select %p212, %s22, 1
        %s214 = smul.addr %s213, 8
        %s215 = scalar_lea.vmem %s0, %s214
        %p216 = pneg %p51
        %p217 = pneg %p48
        %s218 = smul.u32 16, %s23
        %p219 = scmp.lt.s32.totalorder %s218, 47
        %s220 = scalar_select %p219, %s218, 47
        %s221 = smul.addr %s220, 8
        %s222 = scalar_lea.vmem %s1, %s221
        %p223 = pneg %p77
        %p224 = pneg %p74
        %p225 = scmp.lt.s32.totalorder %s23, 2
        %s226 = scalar_select %p225, %s23, 2
        %s227 = scalar_lea.vmem %s2, %s226
        %p228 = pneg %p103
        %p229 = pneg %p100
        %s230 = smul.u32 16, %s23
        %p231 = scmp.lt.s32.totalorder %s230, 47
        %s232 = scalar_select %p231, %s230, 47
        %s233 = smul.addr %s232, 8
        %s234 = scalar_lea.vmem %s3, %s233
        %p235 = pneg %p129
        %p236 = pneg %p126
        %p237 = pneg %p155
        %p238 = pneg %p152
        %s239 = sand.u32 %s142, 1
        %s240 = scalar_lea.sflag [#allocation5], %s239
        %s241 = sand.u32 %s142, 1
        %s242 = smul.addr %s241, 8
        %s243 = scalar_lea.vmem [#allocation4], %s242
        %p244 = scmp.lt.s32.totalorder %s22, 1
        %s245 = scalar_select %p244, %s22, 1
        %s246 = smul.addr %s245, 8
        %s247 = scalar_lea.vmem %s0, %s246
        %s248 = smul.u32 16, %s23
        %p249 = scmp.lt.s32.totalorder %s248, 47
        %s250 = scalar_select %p249, %s248, 47
        %s251 = smul.addr %s250, 8
        %s252 = scalar_lea.vmem %s1, %s251
        %s253 = smul.u32 16, %s23
        %p254 = scmp.lt.s32.totalorder %s23, 2
        %s255 = scalar_select %p254, %s23, 2
        %s256 = scalar_lea.vmem %s2, %s255
        %s257 = smul.u32 16, %s23
        %p258 = scmp.lt.s32.totalorder %s257, 47
        %s259 = scalar_select %p258, %s257, 47
        %s260 = smul.addr %s259, 8
        %s261 = scalar_lea.vmem %s3, %s260
        %s262 = smul.u32 16, %s23
        %p263 = scmp.eq.s32.totalorder %s23, 0
        // Predicated region
        $region37: #{tpu_custom_call.1} parent=35 // pred_check
          %p264 = pneg %p263
        $region38: #{tpu_custom_call.1} parent=35 // pred_check_branch
          %266 = sbr.rel (%p264) target = $region40
        $region39: #{tpu_custom_call.1} parent=35 // pred_region
          %vm267 = vcmask 7168
          %268 = vst.msk [vmem:[#allocation2] sm:$0xff] %vm267, -inf
          %269 = vst [vmem:[#allocation3] sm:$0xff] 0.0
        $region40: #{tpu_custom_call.1} parent=35 // pred_fallthru
          _
        %v270 = vld [vmem:[%s247] sm:$0xff]
        %v271 = vld [vmem:[%s252] sm:$0xff]
        %v272 = vld [vmem:[%s252 + $0x8] sm:$0xff]
        %v273 = vld [vmem:[%s252 + $0x10] sm:$0xff]
        %v274 = vld [vmem:[%s252 + $0x18] sm:$0xff]
        %v275 = vld [vmem:[%s252 + $0x20] sm:$0xff]
        %v276 = vld [vmem:[%s252 + $0x28] sm:$0xff]
        %v277 = vld [vmem:[%s252 + $0x30] sm:$0xff]
        %v278 = vld [vmem:[%s252 + $0x38] sm:$0xff]
        %v279 = vld [vmem:[%s252 + $0x40] sm:$0xff]
        %v280 = vld [vmem:[%s252 + $0x48] sm:$0xff]
        %v281 = vld [vmem:[%s252 + $0x50] sm:$0xff]
        %v282 = vld [vmem:[%s252 + $0x58] sm:$0xff]
        %v283 = vld [vmem:[%s252 + $0x60] sm:$0xff]
        %v284 = vld [vmem:[%s252 + $0x68] sm:$0xff]
        %v285 = vld [vmem:[%s252 + $0x70] sm:$0xff]
        %v286 = vld [vmem:[%s252 + $0x78] sm:$0xff]
        %vm287 = vcmask 261120
        %v289 = vsel %vm287, %v270, 0
        %v292 = vsel %vm287, %v271, 0
        %v295 = vsel %vm287, %v272, 0
        %v298 = vsel %vm287, %v273, 0
        %v301 = vsel %vm287, %v274, 0
        %v304 = vsel %vm287, %v275, 0
        %v307 = vsel %vm287, %v276, 0
        %v310 = vsel %vm287, %v277, 0
        %v313 = vsel %vm287, %v278, 0
        %v316 = vsel %vm287, %v279, 0
        %v319 = vsel %vm287, %v280, 0
        %v322 = vsel %vm287, %v281, 0
        %v325 = vsel %vm287, %v282, 0
        %v328 = vsel %vm287, %v283, 0
        %v331 = vsel %vm287, %v284, 0
        %v334 = vsel %vm287, %v285, 0
        %v337 = vsel %vm287, %v286, 0
        %339 = vmatprep.subr.mxu0 0.0
        %340 = vmatpush1.xpose.msra.mxu0 %v337
        %341 = vmatprep.subr.mxu0 0.0
        %342 = vmatpush1.xpose.msra.mxu0 %v334
        %343 = vmatprep.subr.mxu0 0.0
        %344 = vmatpush1.xpose.msra.mxu0 %v331
        %345 = vmatprep.subr.mxu0 0.0
        %346 = vmatpush1.xpose.msra.mxu0 %v328
        %347 = vmatprep.subr.mxu0 0.0
        %348 = vmatpush1.xpose.msra.mxu0 %v325
        %349 = vmatprep.subr.mxu0 0.0
        %350 = vmatpush1.xpose.msra.mxu0 %v322
        %351 = vmatprep.subr.mxu0 0.0
        %352 = vmatpush1.xpose.msra.mxu0 %v319
        %353 = vmatprep.subr.mxu0 0.0
        %354 = vmatpush1.xpose.msra.mxu0 %v316
        %355 = vmatprep.subr.mxu0 0.0
        %356 = vmatpush1.xpose.msra.mxu0 %v313
        %357 = vmatprep.subr.mxu0 0.0
        %358 = vmatpush1.xpose.msra.mxu0 %v310
        %359 = vmatprep.subr.mxu0 0.0
        %360 = vmatpush1.xpose.msra.mxu0 %v307
        %361 = vmatprep.subr.mxu0 0.0
        %362 = vmatpush1.xpose.msra.mxu0 %v304
        %363 = vmatprep.subr.mxu0 0.0
        %364 = vmatpush1.xpose.msra.mxu0 %v301
        %365 = vmatprep.subr.mxu0 0.0
        %366 = vmatpush1.xpose.msra.mxu0 %v298
        %367 = vmatprep.subr.mxu0 0.0
        %368 = vmatpush1.xpose.msra.mxu0 %v295
        %369 = vmatprep.subr.mxu0 0.0
        %370 = vmatpush1.xpose.msra.mxu0 %v292
        %371 = vmatprep.subr.mxu0 0.0
        %372 = vmatpush2.xpose.msra.mxu0 0.0
        %373 = vmatprep.subr.mxu0 0.0
        %374 = vmatpush2.xpose.msra.mxu0 0.0
        %375 = vmatprep.subr.mxu0 0.0
        %376 = vmatpush2.xpose.msra.mxu0 0.0
        %377 = vmatprep.subr.mxu0 0.0
        %378 = vmatpush2.xpose.msra.mxu0 0.0
        %379 = vmatprep.subr.mxu0 0.0
        %380 = vmatpush2.xpose.msra.mxu0 0.0
        %381 = vmatprep.subr.mxu0 0.0
        %382 = vmatpush2.xpose.msra.mxu0 0.0
        %383 = vmatprep.subr.mxu0 0.0
        %384 = vmatpush2.xpose.msra.mxu0 0.0
        %385 = vmatprep.subr.mxu0 0.0
        %386 = vmatpush2.xpose.msra.mxu0 0.0
        %387 = vmatprep.subr.mxu0 0.0
        %388 = vmatpush2.xpose.msra.mxu0 0.0
        %389 = vmatprep.subr.mxu0 0.0
        %390 = vmatpush2.xpose.msra.mxu0 0.0
        %391 = vmatprep.subr.mxu0 0.0
        %392 = vmatpush2.xpose.msra.mxu0 0.0
        %393 = vmatprep.subr.mxu0 0.0
        %394 = vmatpush2.xpose.msra.mxu0 0.0
        %395 = vmatprep.subr.mxu0 0.0
        %396 = vmatpush2.xpose.msra.mxu0 0.0
        %397 = vmatprep.subr.mxu0 0.0
        %398 = vmatpush2.xpose.msra.mxu0 0.0
        %399 = vmatprep.subr.mxu0 0.0
        %400 = vmatpush2.xpose.msra.mxu0 0.0
        %401 = vmatprep.subr.mxu0 0.0
        %402 = vmatpush2.xpose.msra.mxu0 0.0
        %403 = vmatprep.mubr.f32.mxu0 0.0
        %404 = vmatmul.mubr.f32.gmra.mxu0 %v289
        %v405 = vpop.f32.mrf.mxu0
        %v406 = vadd.f32 0.0, %v405
        %v407 = vpop.f32.mrf.mxu0
        %408 = vdwg.mxu0
        %v409 = vmul.f32 %v406, 0.5
        %v410 = vld [vmem:[%s256] sm:$0x1]
        %v411 = vmul.f32 %v410, 0.25
        %v413 = vlaneseq
        %v414 = vshrl.u32 %v413, 7
        %v415 = vsub.s32 0, %v414
        %v416 = vrot.slane %v411, %v415
        %v418 = vsub.f32 %v409, %v416
        %v419 = vld [vmem:[#allocation2] sm:$0xff]
        %420 = vmax.xlane.f32.xlu0 %v418
        %v421 = vpop.xlane.xlu0 %420
        %v422 = vmax.f32 %v419, %v421
        %v423 = vsub.f32 %v419, %v422
        %v424 = vmul.f32 %v423, 1.442695
        %v425 = vpow.pop %v424
        %427 = vset.pattern.permute.xlu0 0
        %428 = vperm.xlu0 %427, %v422
        %v429 = vpop.permute.xlu0 %428
        %v431 = vsub.f32 %v418, %v429
        %v432 = vmul.f32 %v431, 1.442695
        %v433 = vpow.pop %v432
        %v434 = vld [vmem:[#allocation3] sm:$0xff]
        %436 = vset.pattern.permute.xlu0 0
        %437 = vperm.xlu0 %436, %v425
        %v438 = vpop.permute.xlu0 %437
        %v440 = vmul.f32 %v438, %v434
        %v441 = vld [vmem:[%s261] sm:$0xff]
        %v442 = vld [vmem:[%s261 + $0x8] sm:$0xff]
        %v443 = vld [vmem:[%s261 + $0x10] sm:$0xff]
        %v444 = vld [vmem:[%s261 + $0x18] sm:$0xff]
        %v445 = vld [vmem:[%s261 + $0x20] sm:$0xff]
        %v446 = vld [vmem:[%s261 + $0x28] sm:$0xff]
        %v447 = vld [vmem:[%s261 + $0x30] sm:$0xff]
        %v448 = vld [vmem:[%s261 + $0x38] sm:$0xff]
        %v449 = vld [vmem:[%s261 + $0x40] sm:$0xff]
        %v450 = vld [vmem:[%s261 + $0x48] sm:$0xff]
        %v451 = vld [vmem:[%s261 + $0x50] sm:$0xff]
        %v452 = vld [vmem:[%s261 + $0x58] sm:$0xff]
        %v453 = vld [vmem:[%s261 + $0x60] sm:$0xff]
        %v454 = vld [vmem:[%s261 + $0x68] sm:$0xff]
        %v455 = vld [vmem:[%s261 + $0x70] sm:$0xff]
        %v456 = vld [vmem:[%s261 + $0x78] sm:$0xff]
        %457 = vmatprep.subr.mxu0 0.0
        %458 = vmatpush1.msra.mxu0 %v456
        %459 = vmatprep.subr.mxu0 0.0
        %460 = vmatpush1.msra.mxu0 %v455
        %461 = vmatprep.subr.mxu0 0.0
        %462 = vmatpush1.msra.mxu0 %v454
        %463 = vmatprep.subr.mxu0 0.0
        %464 = vmatpush1.msra.mxu0 %v453
        %465 = vmatprep.subr.mxu0 0.0
        %466 = vmatpush1.msra.mxu0 %v452
        %467 = vmatprep.subr.mxu0 0.0
        %468 = vmatpush1.msra.mxu0 %v451
        %469 = vmatprep.subr.mxu0 0.0
        %470 = vmatpush1.msra.mxu0 %v450
        %471 = vmatprep.subr.mxu0 0.0
        %472 = vmatpush1.msra.mxu0 %v449
        %473 = vmatprep.subr.mxu0 0.0
        %474 = vmatpush1.msra.mxu0 %v448
        %475 = vmatprep.subr.mxu0 0.0
        %476 = vmatpush1.msra.mxu0 %v447
        %477 = vmatprep.subr.mxu0 0.0
        %478 = vmatpush1.msra.mxu0 %v446
        %479 = vmatprep.subr.mxu0 0.0
        %480 = vmatpush1.msra.mxu0 %v445
        %481 = vmatprep.subr.mxu0 0.0
        %482 = vmatpush1.msra.mxu0 %v444
        %483 = vmatprep.subr.mxu0 0.0
        %484 = vmatpush1.msra.mxu0 %v443
        %485 = vmatprep.subr.mxu0 0.0
        %486 = vmatpush1.msra.mxu0 %v442
        %487 = vmatprep.subr.mxu0 0.0
        %488 = vmatpush1.msra.mxu0 %v441
        %489 = vmatprep.subr.mxu0 0.0
        %490 = vmatpush2.msra.mxu0 0.0
        %491 = vmatprep.subr.mxu0 0.0
        %492 = vmatpush2.msra.mxu0 0.0
        %493 = vmatprep.subr.mxu0 0.0
        %494 = vmatpush2.msra.mxu0 0.0
        %495 = vmatprep.subr.mxu0 0.0
        %496 = vmatpush2.msra.mxu0 0.0
        %497 = vmatprep.subr.mxu0 0.0
        %498 = vmatpush2.msra.mxu0 0.0
        %499 = vmatprep.subr.mxu0 0.0
        %500 = vmatpush2.msra.mxu0 0.0
        %501 = vmatprep.subr.mxu0 0.0
        %502 = vmatpush2.msra.mxu0 0.0
        %503 = vmatprep.subr.mxu0 0.0
        %504 = vmatpush2.msra.mxu0 0.0
        %505 = vmatprep.subr.mxu0 0.0
        %506 = vmatpush2.msra.mxu0 0.0
        %507 = vmatprep.subr.mxu0 0.0
        %508 = vmatpush2.msra.mxu0 0.0
        %509 = vmatprep.subr.mxu0 0.0
        %510 = vmatpush2.msra.mxu0 0.0
        %511 = vmatprep.subr.mxu0 0.0
        %512 = vmatpush2.msra.mxu0 0.0
        %513 = vmatprep.subr.mxu0 0.0
        %514 = vmatpush2.msra.mxu0 0.0
        %515 = vmatprep.subr.mxu0 0.0
        %516 = vmatpush2.msra.mxu0 0.0
        %517 = vmatprep.subr.mxu0 0.0
        %518 = vmatpush2.msra.mxu0 0.0
        %519 = vmatprep.subr.mxu0 0.0
        %520 = vmatpush2.msra.mxu0 0.0
        %521 = vmatprep.mubr.f32.mxu0 0.0
        %522 = vmatmul.mubr.f32.gmra.mxu0 %v433
        %v523 = vpop.f32.mrf.mxu0
        %v524 = vadd.f32 0.0, %v523
        %v525 = vpop.f32.mrf.mxu0
        %526 = vdwg.mxu0
        %v527 = vadd.f32 %v440, %v524
        %528 = vst [vmem:[#allocation3] sm:$0xff] %v527
        %vm529 = vcmask 7168
        %530 = vst.msk [vmem:[#allocation2] sm:$0xff] %vm529, %v422
        %p531 = scmp.eq.s32.totalorder %s23, 2
        // Predicated region
        $region41: #{tpu_custom_call.1} parent=35 // pred_check
          %p532 = pneg %p531
        $region42: #{tpu_custom_call.1} parent=35 // pred_check_branch
          %534 = sbr.rel (%p532) target = $region44
        $region43: #{tpu_custom_call.1} parent=35 // pred_region
          %v535 = vld [vmem:[#allocation3] sm:$0xff]
          %v536 = vlog2.pop %v535
          %v537 = vmul.f32 %v536, 0.6931472
          %539 = vset.pattern.permute.xlu0 4
          %540 = vperm.xlu0 %539, %v537
          %v541 = vpop.permute.xlu0 %540
          %v543 = vsub.f32 %v537, %v541
          %v544 = vmax.f32 %v543, -18.420681
          %545 = vst [vmem:[%s243] sm:$0xff] %v544
        $region44: #{tpu_custom_call.1} parent=35 // pred_fallthru
          _
        %s546 = sand.u32 %s142, 1
        %s547 = scalar_lea.sflag [#allocation5], %s546
        %s548 = sand.u32 %s142, 1
        %s549 = smul.addr %s548, 8
        %s550 = scalar_lea.vmem [#allocation4], %s549
        // Predicated region
        $region45: #{tpu_custom_call.1} parent=35 // pred_check
          %p551 = pneg %p152
        $region46: #{tpu_custom_call.1} parent=35 // pred_check_branch
          %553 = sbr.rel (%p551) target = $region48
        $region47: #{tpu_custom_call.1} parent=35 // pred_region
          %s555 = ssub.s32 128, 128
          %556 = vsyncadd %s547, %s555
          %s557 = smul.addr %s22, 128
          %s558 = scalar_lea.hbm %s4, %s557
          %s560 = sshll.u32 %s550, 4
          %s561 = int_to_ptr.vmem [resolvable:$true] %s560
          %563 = dma.vmem_to_hbm [thread:$0]  %s561, 128, %s558, %s547
        $region48: #{tpu_custom_call.1} parent=35 // pred_fallthru
          _
      $region36: #{tpu_custom_call.1} parent=5 // pred_fallthru
        _
      %p564 = scmp.le.s32.totalorder 2, %s13
      // Predicated region
      $region49: #{tpu_custom_call.1} parent=5 // pred_check
        %p565 = pneg %p564
      $region50: #{tpu_custom_call.1} parent=5 // pred_check_branch
        %567 = sbr.rel (%p565) target = $region52
      $region51: #{tpu_custom_call.1} parent=5 // pred_region
        %s568 = ssub.s32 %s13, 2
        // Predicated region
        $region53: #{tpu_custom_call.1} parent=51 // pred_check
          %p569 = pneg %p158
        $region54: #{tpu_custom_call.1} parent=51 // pred_check_branch
          %571 = sbr.rel (%p569) target = $region56
        $region55: #{tpu_custom_call.1} parent=51 // pred_region
          %s572 = sand.u32 %s143, 1
          %s573 = scalar_lea.sflag [#allocation5], %s572
          %s574 = sand.u32 %s143, 1
          %s575 = smul.addr %s574, 8
          %s576 = scalar_lea.vmem [#allocation4], %s575
          %577 = dma.done %s573, 128
        $region56: #{tpu_custom_call.1} parent=51 // pred_fallthru
          _
      $region52: #{tpu_custom_call.1} parent=5 // pred_fallthru
        _
    $region6: #{tpu_custom_call.1} parent=1 // loop_footer
      %s17 = sadd.s32 1, %s13
    $region7: #{tpu_custom_call.1} parent=1 // loop_footer_branch
      %12 = sbr.rel target = $region3
    $region8: #{tpu_custom_call.1} parent=1 // loop_exit
      _
    %578 = vsyncpa [#allocation5], 1
    %s579 = scalar_lea.sflag [#allocation5], 1
    %580 = vsyncpa %s579, 1

</llo_original>
